<compile_context>
chip_gen: v5e
topology: v5e:2x2
jax: 0.10.0
libtpu: 0.0.40
codegen_flags: <defaults>
</compile_context>

<pallas_src>
import jax
import jax.numpy as jnp
from jax import lax
from jax.experimental import pallas as pl
from jax.experimental.pallas import tpu as pltpu


def _round_up(x: int, m: int) -> int:
    return -(-x // m) * m


def _embed_gather_kernel(ids_ref, table_ref, out_ref, row_buf, sem):
    """Gather `tt` embedding rows from HBM into one lane-dense output tile.

    ids_ref:   SMEM [Tp]       int32  flattened (padded) token ids, prefetched
    table_ref: HBM  [V, Dp]    table  (memory_space=ANY -> manual DMA only)
    out_ref:   VMEM [tt, Dp]   output tile for this grid step
    row_buf:   VMEM [tt, Dp]   DMA landing buffer
    sem:       DMA semaphore, shape (1,), shared by all row copies of the tile
    """
    i = pl.program_id(0)
    tt = out_ref.shape[0]
    v = table_ref.shape[0]
    base = i * tt

    # Issue all row DMAs for this tile; they proceed concurrently on the DMA
    # engine while we keep issuing.
    def issue(r, carry):
        tok = ids_ref[base + r]
        tok = jnp.minimum(jnp.maximum(tok, 0), v - 1)  # clamp OOB ids
        pltpu.make_async_copy(
            table_ref.at[pl.ds(tok, 1)],      # [1, Dp] row in HBM
            row_buf.at[pl.ds(r, 1)],          # [1, Dp] row in VMEM
            sem.at[0],
        ).start()
        return carry

    lax.fori_loop(0, tt, issue, 0)

    # Drain: every copy signals the shared semaphore by one (identically sized)
    # row's worth, so waiting once per row balances the count exactly.
    def drain(r, carry):
        pltpu.make_async_copy(
            table_ref.at[pl.ds(0, 1)],
            row_buf.at[pl.ds(r, 1)],
            sem.at[0],
        ).wait()
        return carry

    lax.fori_loop(0, tt, drain, 0)

    # Lane-dense store of the whole tile (Dp is a multiple of 128).
    out_ref[...] = row_buf[...]


def embed_forward(tokens, table, *, tokens_per_tile: int = 256):
    """Equivalent of Embed.forward: embds = word_emb(tokens).

    tokens: integer array of arbitrary shape (e.g. [B, S])
    table:  [V, D] embedding table
    returns tokens.shape + (D,) embeddings with table.dtype.
    """
    V, D = table.shape
    lead_shape = tuple(tokens.shape)
    T = 1
    for s in lead_shape:
        T *= int(s)

    # Lane-dense output: pad the embedding dim to a multiple of 128.
    Dp = _round_up(max(D, 1), 128)
    if Dp != D:
        table = jnp.pad(table, ((0, 0), (0, Dp - D)))

    # Token tile: large to amortize per-grid-step overhead, multiple of 8 so
    # the output BlockSpec obeys the (8, 128) rule; pad T up to a multiple.
    tt = min(int(tokens_per_tile), _round_up(T, 8))
    tt = _round_up(tt, 8)
    Tp = _round_up(T, tt)

    ids = tokens.reshape(T).astype(jnp.int32)
    if Tp != T:
        # Padded slots gather row 0; they are sliced off below.
        ids = jnp.pad(ids, (0, Tp - T))

    grid = (Tp // tt,)
    out = pl.pallas_call(
        _embed_gather_kernel,
        out_shape=jax.ShapeDtypeStruct((Tp, Dp), table.dtype),
        grid_spec=pltpu.PrefetchScalarGridSpec(
            num_scalar_prefetch=1,                        # ids -> SMEM
            grid=grid,
            in_specs=[pl.BlockSpec(memory_space=pl.ANY)],  # table stays in HBM
            out_specs=pl.BlockSpec((tt, Dp), lambda i, ids_ref: (i, 0)),
            scratch_shapes=[
                pltpu.VMEM((tt, Dp), table.dtype),         # gather landing buffer
                pltpu.SemaphoreType.DMA((1,)),             # shared row-DMA sem
            ],
        ),
        compiler_params=pltpu.CompilerParams(
            dimension_semantics=("parallel",),             # v7x: 2 TCs split tiles
        ),
    )(ids, table)

    out = out[:T, :D]
    return out.reshape(lead_shape + (D,))


if __name__ == "__main__":
    # Hyper-params consistent with Embed(n_vocab, emb_dim, key_in, key_out).
    n_vocab = 32
    emb_dim = 32
    batch = 2
    seq = 8

    key = jax.random.PRNGKey(0)
    k_tab, k_tok = jax.random.split(key)

    # nn.Embedding default init is N(0, 1) — deterministic synthetic weights.
    word_emb_weight = jax.random.normal(k_tab, (n_vocab, emb_dim), dtype=jnp.float32)
    tokens = jax.random.randint(k_tok, (batch, seq), 0, n_vocab, dtype=jnp.int32)

    # forward: batch_dict[key_out] = word_emb(batch_dict[key_in])
    batch_dict = {"tokens": tokens}
    embds = embed_forward(batch_dict["tokens"], word_emb_weight)
    embds = jax.block_until_ready(embds)
    batch_dict["embeddings"] = embds

    # Reference check against a plain-JAX embedding lookup.
    ref = jnp.take(word_emb_weight, tokens, axis=0)
    assert embds.shape == (batch, seq, emb_dim)
    assert embds.dtype == jnp.float32
    assert jnp.allclose(embds, ref, atol=1e-6), "mismatch vs reference gather"

    print("KERNEL_OK")
</pallas_src>

<mosaic_0001>
module attributes {stable_mosaic.version = 11 : i64} {
  func.func @_embed_gather_kernel(%arg0: i32, %arg1: memref<16xi32, #tpu.memory_space<smem>>, %arg2: memref<32x128xf32, #tpu.memory_space<any>>, %arg3: memref<16x128xf32, #tpu.memory_space<vmem>>, %arg4: memref<16x128xf32, #tpu.memory_space<vmem>>, %arg5: memref<1x!tpu.dma_semaphore, #tpu.memory_space<semaphore_mem>>) attributes {dimension_semantics = [#tpu.dimension_semantics<parallel>], iteration_bounds = array<i64: 1>, scalar_prefetch = 1 : i64, scratch_operands = 2 : i64, tpu.core_type = #tpu.core_type<tc>, window_params = [{}, {transform_indices = @transform_1, window_bounds = array<i64: 16, 128>}]} {
    %c16_i32 = arith.constant 16 : i32
    %0 = arith.muli %arg0, %c16_i32 : i32
    %c0_i32 = arith.constant 0 : i32
    %c16_i32_0 = arith.constant 16 : i32
    %1 = arith.addi %c0_i32, %c16_i32_0 : i32
    %c1_i32 = arith.constant 1 : i32
    scf.for %arg6 = %c0_i32 to %1 step %c1_i32  : i32 {
      %5 = arith.addi %0, %arg6 : i32
      %6 = arith.index_cast %5 : i32 to index
      %7 = memref.load %arg1[%6] : memref<16xi32, #tpu.memory_space<smem>>
      %c0_i32_9 = arith.constant 0 : i32
      %8 = arith.maxsi %7, %c0_i32_9 : i32
      %c31_i32 = arith.constant 31 : i32
      %9 = arith.minsi %8, %c31_i32 : i32
      %c0_i32_10 = arith.constant 0 : i32
      %c0_i32_11 = arith.constant 0 : i32
      %10 = tpu.memref_slice %arg2[%9, %c0_i32_11] : memref<32x128xf32, #tpu.memory_space<any>> -> memref<1x128xf32, #tpu.memory_space<any>>
      %c0_i32_12 = arith.constant 0 : i32
      %11 = tpu.memref_slice %arg4[%arg6, %c0_i32_12] : memref<16x128xf32, #tpu.memory_space<vmem>> -> memref<1x128xf32, #tpu.memory_space<vmem>>
      %12 = tpu.memref_slice %arg5[%c0_i32_10] : memref<1x!tpu.dma_semaphore, #tpu.memory_space<semaphore_mem>> -> memref<1x!tpu.dma_semaphore, #tpu.memory_space<semaphore_mem>>
      %13 = tpu.memref_squeeze %12 : memref<1x!tpu.dma_semaphore, #tpu.memory_space<semaphore_mem>> -> memref<!tpu.dma_semaphore, #tpu.memory_space<semaphore_mem>>
      tpu.enqueue_dma source(%10 : memref<1x128xf32, #tpu.memory_space<any>>) target(%11 : memref<1x128xf32, #tpu.memory_space<vmem>>) target_semaphore(%13 : memref<!tpu.dma_semaphore, #tpu.memory_space<semaphore_mem>>)
    }
    %c16_i32_1 = arith.constant 16 : i32
    %c0_i32_2 = arith.constant 0 : i32
    %c16_i32_3 = arith.constant 16 : i32
    %2 = arith.addi %c0_i32_2, %c16_i32_3 : i32
    %c1_i32_4 = arith.constant 1 : i32
    scf.for %arg6 = %c0_i32_2 to %2 step %c1_i32_4  : i32 {
      %c0_i32_9 = arith.constant 0 : i32
      %c0_i32_10 = arith.constant 0 : i32
      %c0_i32_11 = arith.constant 0 : i32
      %5 = tpu.memref_slice %arg2[%c0_i32_10, %c0_i32_11] : memref<32x128xf32, #tpu.memory_space<any>> -> memref<1x128xf32, #tpu.memory_space<any>>
      %c0_i32_12 = arith.constant 0 : i32
      %6 = tpu.memref_slice %arg4[%arg6, %c0_i32_12] : memref<16x128xf32, #tpu.memory_space<vmem>> -> memref<1x128xf32, #tpu.memory_space<vmem>>
      %7 = tpu.memref_slice %arg5[%c0_i32_9] : memref<1x!tpu.dma_semaphore, #tpu.memory_space<semaphore_mem>> -> memref<1x!tpu.dma_semaphore, #tpu.memory_space<semaphore_mem>>
      %8 = tpu.memref_squeeze %7 : memref<1x!tpu.dma_semaphore, #tpu.memory_space<semaphore_mem>> -> memref<!tpu.dma_semaphore, #tpu.memory_space<semaphore_mem>>
      tpu.wait_dma2 semaphore(%8 : memref<!tpu.dma_semaphore, #tpu.memory_space<semaphore_mem>>) src(%5 : memref<1x128xf32, #tpu.memory_space<any>>) dst(%6 : memref<1x128xf32, #tpu.memory_space<vmem>>)
    }
    %c16_i32_5 = arith.constant 16 : i32
    %c0 = arith.constant 0 : index
    %c0_6 = arith.constant 0 : index
    %3 = vector.load %arg4[%c0, %c0_6] : memref<16x128xf32, #tpu.memory_space<vmem>>, vector<16x128xf32>
    %c0_7 = arith.constant 0 : index
    %c0_8 = arith.constant 0 : index
    %4 = vector.load %arg3[%c0_7, %c0_8] : memref<16x128xf32, #tpu.memory_space<vmem>>, vector<16x128xf32>
    tpu.vector_store %arg3[%c0_7, %c0_8], %3 {strides = array<i32>} : memref<16x128xf32, #tpu.memory_space<vmem>>, vector<16x128xf32>,
    return
  }
  func.func @transform_1(%arg0: i32, %arg1: memref<16xi32, #tpu.memory_space<smem>>) -> (i32, i32) {
    %c0_i32 = arith.constant 0 : i32
    %c0_i32_0 = arith.constant 0 : i32
    return %arg0, %c0_i32 : i32, i32
  }
}

</mosaic_0001>

<llo_original>
// kernel: tpu_custom_call.1
$region0: #{tpu_custom_call.1}
  #allocation0 [shape = 'u32[]', space=smem, size = 0x4, offset = 0x4, fixed_abs, tag = 'smem constant byte address 0x4 - core index']
  #allocation1 [shape = 'u32[72,128]{1,0:T(1,128)}', space=vmem, size = 0x9000, scoped, tag = 'internal scratch']
  #allocation2 [shape = 'f32[16,128]{1,0:T(8,128)}', space=vmem, size = 0x2000, scoped, tag = 'scratch operand']
  #allocation3 [shape = 's32[1]{0}', space=sflag, size = 0x4, scoped, tag = 'scratch operand']
  #allocation4 [shape = 's32[1]{0}', space=sflag, size = 0x4, scoped, tag = 'scoped memory for tpu_custom_call.1']
  #allocation5 [shape = 'u8[512]{0}', space=smem, size = 0x200, scoped, tag = 'prefetched SMEM operand 0']
  #allocation8 [shape = 's32[]', space=sflag, size = 0x4, offset = 0, fixed_abs, tag = 'sflag constant byte address 0x0 - dummy sync flag']
  #allocation9 [shape = 's32[]', space=sflag, size = 0x4, offset = 0, fixed_abs, tag = 'sflag constant byte address 0x0 - dummy sync flag']
  #allocation10 [shape = 'u32[]', space=smem, size = 0x4, offset = 0x44, fixed_abs, tag = 'smem constant byte address 0x44 - assertion arg 0']
  #allocation11 [shape = 'u32[]', space=smem, size = 0x4, offset = 0x48, fixed_abs, tag = 'smem constant byte address 0x48 - assertion arg 1']
  %s0 = inlined_call_operand.hbm [shape: s32[16], index: 0, kind: input, shape index: {}]
  %s1 = inlined_call_operand.hbm [shape: f32[32,128], index: 1, kind: input, shape index: {}]
  %s2 = inlined_call_operand.hbm [shape: f32[16,128], index: 2, kind: output, shape index: {}]
  %s3 = sld [smem:[#allocation0]]
  $region28: #{tpu_custom_call.1} parent=0
    _
  %s5 = ssub.s32 1, %s3
  %s6 = scalar_select 0, %s5, %s3
  %s8 = sshll.u32 %s0, 4
  %s9 = int_to_ptr.hbm [resolvable:$true] %s8
  %11 = dma.hbm_to_smem %s9, 16, [#allocation5], [#allocation4]
  %13 = dma.done [#allocation4], 16
  %14 = sfence
  $region1: #{tpu_custom_call.1} parent=0
    #allocation6 [shape = 'u8[8192]{0}', space=vmem, size = 0x2000, scoped, tag = 'output window, operand 0, single buffered']
    #allocation7 [shape = 's32[1]{0}', space=sflag, size = 0x4, scoped, tag = 'scoped memory for tpu_custom_call.1']
    %15 = vsyncpa [#allocation7], 0
    %s16 = smul.u32 0, 16
    loop: start=0, step=1, limit=16
    $region2: #{tpu_custom_call.1} parent=1 // loop_pre_header
      _
    $region3: #{tpu_custom_call.1} parent=1 // loop_header
      %s18 = sphi 0, %s22
      %p19 = scmp.ge.s32.totalorder %s18, 16
    $region4: #{tpu_custom_call.1} parent=1 // loop_header_branch
      %21 = sbr.rel (%p19) target = $region8
    $region5: #{tpu_custom_call.1} parent=1 // loop_body
      %s23 = sadd.s32 %s16, %s18
      %s24 = sld [smem:[#allocation5 + %s23]]
      %p25 = scmp.gt.s32.totalorder %s24, 0
      %s26 = scalar_select %p25, %s24, 0
      %p27 = scmp.lt.s32.totalorder %s26, 31
      %s28 = scalar_select %p27, %s26, 31
      %s29 = scalar_lea.hbm %s1, %s28
      %s30 = scalar_lea.vmem [#allocation2], %s18
      // Predicated region
      $region9: #{tpu_custom_call.1} parent=5 // pred_check
        _
      $region10: #{tpu_custom_call.1} parent=5 // pred_check_branch
        %32 = sbr.rel target = $region12
      $region11: #{tpu_custom_call.1} parent=5 // pred_region
        %33 = sst [smem:[#allocation10]] [#allocation9]
        %34 = sst [smem:[#allocation11]] [#allocation8]
      $region12: #{tpu_custom_call.1} parent=5 // pred_fallthru
        _
      %36 = shalt.err (0)
      %s38 = sshll.u32 %s29, 4
      %s39 = int_to_ptr.hbm [resolvable:$true] %s38
      %s40 = sshll.u32 %s30, 4
      %s41 = int_to_ptr.vmem [resolvable:$true] %s40
      %43 = dma.hbm_to_vmem [thread:$0]  %s39, 16, %s41, [#allocation3]
    $region6: #{tpu_custom_call.1} parent=1 // loop_footer
      %s22 = sadd.s32 1, %s18
    $region7: #{tpu_custom_call.1} parent=1 // loop_footer_branch
      %17 = sbr.rel target = $region3
    $region8: #{tpu_custom_call.1} parent=1 // loop_exit
      _
    loop: start=0, step=1, limit=16
    $region13: #{tpu_custom_call.1} parent=1 // loop_pre_header
      _
    $region14: #{tpu_custom_call.1} parent=1 // loop_header
      %s45 = sphi 0, %s49
      %p46 = scmp.ge.s32.totalorder %s45, 16
    $region15: #{tpu_custom_call.1} parent=1 // loop_header_branch
      %48 = sbr.rel (%p46) target = $region19
    $region16: #{tpu_custom_call.1} parent=1 // loop_body
      %s50 = smul.u32 1, 1
      %s51 = sshll.u32 %s50, 4
      %52 = dma.done [#allocation3], %s51
    $region17: #{tpu_custom_call.1} parent=1 // loop_footer
      %s49 = sadd.s32 1, %s45
    $region18: #{tpu_custom_call.1} parent=1 // loop_footer_branch
      %44 = sbr.rel target = $region14
    $region19: #{tpu_custom_call.1} parent=1 // loop_exit
      _
    %v53 = vld [vmem:[#allocation2] sm:$0xff]
    %v54 = vld [vmem:[#allocation2 + $0x8] sm:$0xff]
    %55 = vst [vmem:[#allocation6] sm:$0xff] %v53
    %56 = vst [vmem:[#allocation6 + $0x8] sm:$0xff] %v54
    // Predicated region
    $region20: #{tpu_custom_call.1} parent=1 // pred_check
      _
    $region21: #{tpu_custom_call.1} parent=1 // pred_check_branch
      %58 = sbr.rel (0) target = $region23
    $region22: #{tpu_custom_call.1} parent=1 // pred_region
      %60 = vsyncadd [#allocation7], 0
      %s61 = sshll.u32 [#allocation6], 4
      %s62 = int_to_ptr.vmem [resolvable:$true] %s61
      %s63 = sshll.u32 %s2, 4
      %s64 = int_to_ptr.hbm [resolvable:$true] %s63
      %69 = dma.vmem_to_hbm [thread:$0]  %s62, 256, %s64, [#allocation7], 128, 128, 8
    $region23: #{tpu_custom_call.1} parent=1 // pred_fallthru
      _
    // Predicated region
    $region24: #{tpu_custom_call.1} parent=1 // pred_check
      _
    $region25: #{tpu_custom_call.1} parent=1 // pred_check_branch
      %71 = sbr.rel (0) target = $region27
    $region26: #{tpu_custom_call.1} parent=1 // pred_region
      %73 = dma.done [#allocation7], 256
    $region27: #{tpu_custom_call.1} parent=1 // pred_fallthru
      _
    %74 = vsyncpa [#allocation7], 1
  %75 = vsyncmov [#allocation3]
  %s76 = vpop.sfrf %75
  %p77 = scmp.eq.s32.totalorder %s76, 0
  %p78 = pneg %p77
  %80 = shalt.err (%p78)

</llo_original>
